<compile_context>
chip_gen: v6e
topology: v6e:2x2x1
jax: 0.10.0
libtpu: 0.0.40
codegen_flags: <defaults>
</compile_context>

<pallas_src>
import functools

import jax
import jax.numpy as jnp
from jax.experimental import pallas as pl
from jax.experimental.pallas import tpu as pltpu

EPS = 1e-5          # nn.InstanceNorm2d default eps (affine=False, no running stats)
NEG_SLOPE = 0.01    # nn.LeakyReLU default negative_slope


def _instance_norm_lrelu(y):
    """InstanceNorm2d(affine=False) over the spatial axis + LeakyReLU.
    y: (P, C) float32, stats per channel over P.  Two-pass (mean, centered var)."""
    inv_p = 1.0 / y.shape[0]
    mean = jnp.sum(y, axis=0, keepdims=True) * inv_p
    d = y - mean
    var = jnp.sum(d * d, axis=0, keepdims=True) * inv_p
    y = d * jax.lax.rsqrt(var + EPS)
    return jnp.where(y >= 0.0, y, NEG_SLOPE * y)


def _down_conv_kernel(x_ref, w1_ref, w2_ref, o_ref, ypad_ref, xcol2_ref, *,
                      Ho, Wo, Cout, compute_dtype):
    """Fused Down_Conv for one sample.

    x_ref    : (1, P, 9*Cin)        stage-1 im2col patches (lane-dense), MXU dtype
    w1_ref   : (9*Cin, Cout)        stage-1 weights, tap-major K
    w2_ref   : (9*Cout, Cout)       stage-2 weights, tap-major K
    o_ref    : (1, P, Cout)         final activations (f32)
    ypad_ref : VMEM (Ho+2, Wo+2, Cout) f32  stage-1 output with pad=1 halo
    xcol2_ref: VMEM (Ho, Wo, 9*Cout)   f32  stage-2 im2col staging (write-only)
    """
    P = Ho * Wo

    # ---- Stage 1: 3x3 / stride 2 conv as ONE GEMM (K = 9*Cin), f32 accum in vregs.
    y1 = jnp.dot(x_ref[0], w1_ref[...], preferred_element_type=jnp.float32)   # (P, Cout)
    y1 = _instance_norm_lrelu(y1)

    # ---- pad=1 halo for stage 2, entirely in VMEM (no HBM round trip).
    ypad_ref[...] = jnp.zeros_like(ypad_ref)
    ypad_ref[1:1 + Ho, 1:1 + Wo, :] = y1.reshape(Ho, Wo, Cout)

    # ---- Stage 2 im2col built in VMEM: nine static tap slices written into the
    #      staging buffer (plain stores, no accumulator read-modify-write).
    for ky in range(3):
        for kx in range(3):
            t = 3 * ky + kx
            xcol2_ref[:, :, t * Cout:(t + 1) * Cout] = ypad_ref[ky:ky + Ho, kx:kx + Wo, :]

    # ---- Stage 2: 3x3 / stride 1 conv as ONE GEMM (K = 9*Cout).
    xcol2 = xcol2_ref[...].reshape(P, 9 * Cout).astype(compute_dtype)
    y2 = jnp.dot(xcol2, w2_ref[...], preferred_element_type=jnp.float32)      # (P, Cout)
    y2 = _instance_norm_lrelu(y2)
    o_ref[0] = y2.astype(o_ref.dtype)


def _im2col_stride2(x_nhwc, compute_dtype):
    """(N,H,W,Cin) -> (N, Ho*Wo, 9*Cin) patches of the 3x3 / stride-2 / pad-1 conv.
    Pure layout pass done by XLA; K ordering is (ky, kx, cin) to match the
    (3,3,Cin,Cout) -> (9*Cin, Cout) weight reshape."""
    N, H, W, Cin = x_nhwc.shape
    Ho = (H - 1) // 2 + 1
    Wo = (W - 1) // 2 + 1
    xp = jnp.pad(x_nhwc, ((0, 0), (1, 1), (1, 1), (0, 0)))
    taps = []
    for ky in range(3):
        for kx in range(3):
            taps.append(xp[:, ky:ky + 2 * (Ho - 1) + 1:2,
                           kx:kx + 2 * (Wo - 1) + 1:2, :])      # (N, Ho, Wo, Cin)
    xcol = jnp.stack(taps, axis=3).reshape(N, Ho * Wo, 9 * Cin)
    return xcol.astype(compute_dtype), Ho, Wo


def init_params(key, in_channels, out_channels):
    """Deterministic synthetic parameters (shapes match nn.Conv2d, stored HWIO).
    Biases kept for interface parity but are exact no-ops here (InstanceNorm
    cancels them), so the Pallas path never touches them."""
    k1, k2, k3, k4 = jax.random.split(key, 4)
    return {
        "w1": jax.random.normal(k1, (3, 3, in_channels, out_channels), jnp.float32) * 0.1,
        "b1": jax.random.normal(k2, (out_channels,), jnp.float32) * 0.1,
        "w2": jax.random.normal(k3, (3, 3, out_channels, out_channels), jnp.float32) * 0.1,
        "b2": jax.random.normal(k4, (out_channels,), jnp.float32) * 0.1,
    }


def down_conv(params, x_nchw, *, compute_dtype=jnp.bfloat16):
    """Down_Conv forward. Takes/returns NCHW (PyTorch convention)."""
    N, Cin, H, W = x_nchw.shape
    Cout = params["w1"].shape[-1]
    assert Cout <= 128, "fused single-tile path assumes Cout <= 128 (see TODOs)"

    x_nhwc = jnp.transpose(x_nchw, (0, 2, 3, 1)).astype(jnp.float32)
    xcol1, Ho, Wo = _im2col_stride2(x_nhwc, compute_dtype)
    P = Ho * Wo

    # Weights as tap-major GEMM operands, MXU dtype.
    w1 = params["w1"].reshape(9 * Cin, Cout).astype(compute_dtype)
    w2 = params["w2"].reshape(9 * Cout, Cout).astype(compute_dtype)

    kernel = functools.partial(_down_conv_kernel, Ho=Ho, Wo=Wo, Cout=Cout,
                               compute_dtype=compute_dtype)
    y = pl.pallas_call(
        kernel,
        out_shape=jax.ShapeDtypeStruct((N, P, Cout), jnp.float32),
        grid=(N,),
        in_specs=[
            pl.BlockSpec((1, P, 9 * Cin), lambda n: (n, 0, 0)),
            pl.BlockSpec((9 * Cin, Cout), lambda n: (0, 0)),
            pl.BlockSpec((9 * Cout, Cout), lambda n: (0, 0)),
        ],
        out_specs=pl.BlockSpec((1, P, Cout), lambda n: (n, 0, 0)),
        scratch_shapes=[
            pltpu.VMEM((Ho + 2, Wo + 2, Cout), jnp.float32),   # padded y1
            pltpu.VMEM((Ho, Wo, 9 * Cout), jnp.float32),       # stage-2 im2col
        ],
        compiler_params=pltpu.CompilerParams(
            dimension_semantics=("parallel",)),
    )(xcol1, w1, w2)

    y = y.reshape(N, Ho, Wo, Cout)
    return jnp.transpose(y, (0, 3, 1, 2))                      # NHWC -> NCHW


def _ref_down_conv(params, x_nchw, compute_dtype=jnp.float32):
    """Pure-JAX reference (XLA conv). Includes the conv bias to demonstrate that
    dropping it in the kernel is exact (InstanceNorm cancels it)."""
    x = jnp.transpose(x_nchw, (0, 2, 3, 1)).astype(jnp.float32)

    def stage(h, w, b, stride):
        y = jax.lax.conv_general_dilated(
            h.astype(compute_dtype), w.astype(compute_dtype),
            window_strides=(stride, stride), padding=((1, 1), (1, 1)),
            dimension_numbers=("NHWC", "HWIO", "NHWC"),
            preferred_element_type=jnp.float32)
        y = y + b[None, None, None, :]
        mean = jnp.mean(y, axis=(1, 2), keepdims=True)
        var = jnp.mean(jnp.square(y - mean), axis=(1, 2), keepdims=True)
        y = (y - mean) * jax.lax.rsqrt(var + EPS)
        return jnp.where(y >= 0, y, NEG_SLOPE * y)

    y = stage(x, params["w1"], params["b1"], 2)
    y = stage(y, params["w2"], params["b2"], 1)
    return jnp.transpose(y, (0, 3, 1, 2))


if __name__ == "__main__":
    key = jax.random.PRNGKey(0)
    k_x, k_p = jax.random.split(key)
    N, Cin, H, W, Cout = 2, 4, 16, 16, 8

    x = jax.random.normal(k_x, (N, Cin, H, W), jnp.float32)
    params = init_params(k_p, Cin, Cout)

    # bf16 MXU path (default): compare against an identically-quantized reference.
    out_bf16 = jax.jit(functools.partial(down_conv, compute_dtype=jnp.bfloat16))(params, x)
    jax.block_until_ready(out_bf16)
    assert out_bf16.shape == (N, Cout, H // 2, W // 2), out_bf16.shape
    ref_bf16 = _ref_down_conv(params, x, compute_dtype=jnp.bfloat16)
    err_bf16 = float(jnp.max(jnp.abs(out_bf16 - ref_bf16)))
    assert err_bf16 < 3e-2, f"bf16 path max abs err {err_bf16}"

    # f32 path: tight check against the f32 XLA reference.
    out_f32 = jax.jit(functools.partial(down_conv, compute_dtype=jnp.float32))(params, x)
    jax.block_until_ready(out_f32)
    ref_f32 = _ref_down_conv(params, x, compute_dtype=jnp.float32)
    err_f32 = float(jnp.max(jnp.abs(out_f32 - ref_f32)))
    assert err_f32 < 1e-4, f"f32 path max abs err {err_f32}"

    print("KERNEL_OK")
</pallas_src>

<mosaic_0001>
module attributes {stable_mosaic.version = 11 : i64} {
  func.func @_down_conv_kernel(%arg0: i32, %arg1: memref<1x64x36xbf16, #tpu.memory_space<vmem>>, %arg2: memref<36x8xbf16, #tpu.memory_space<vmem>>, %arg3: memref<72x8xbf16, #tpu.memory_space<vmem>>, %arg4: memref<1x64x8xf32, #tpu.memory_space<vmem>>, %arg5: memref<10x10x8xf32, #tpu.memory_space<vmem>>, %arg6: memref<8x8x72xf32, #tpu.memory_space<vmem>>) attributes {dimension_semantics = [#tpu.dimension_semantics<parallel>], iteration_bounds = array<i64: 2>, scalar_prefetch = 0 : i64, scratch_operands = 2 : i64, tpu.core_type = #tpu.core_type<tc>, window_params = [{transform_indices = @transform_0, window_bounds = array<i64: 1, 64, 36>}, {pipeline_mode = #tpu.pipeline_mode<synchronous>, transform_indices = @transform_1, window_bounds = array<i64: 36, 8>}, {pipeline_mode = #tpu.pipeline_mode<synchronous>, transform_indices = @transform_2, window_bounds = array<i64: 72, 8>}, {transform_indices = @transform_3, window_bounds = array<i64: 1, 64, 8>}]} {
    %c0 = arith.constant 0 : index
    %c0_0 = arith.constant 0 : index
    %c0_1 = arith.constant 0 : index
    %0 = vector.load %arg1[%c0, %c0_0, %c0_1] : memref<1x64x36xbf16, #tpu.memory_space<vmem>>, vector<1x64x36xbf16>
    %1 = vector.shape_cast %0 : vector<1x64x36xbf16> to vector<64x36xbf16>
    %c0_2 = arith.constant 0 : index
    %c0_3 = arith.constant 0 : index
    %2 = vector.load %arg2[%c0_2, %c0_3] : memref<36x8xbf16, #tpu.memory_space<vmem>>, vector<36x8xbf16>
    %cst = arith.constant dense<0.000000e+00> : vector<64x8xf32>
    %3 = tpu.matmul %1, %2, %cst {dimension_numbers = #tpu.dot_dimension_numbers<[1], [0], [0], [1], [0, 0, 1, 1], [], []>} : vector<64x36xbf16>, vector<36x8xbf16>, vector<64x8xf32> -> vector<64x8xf32>
    %cst_4 = arith.constant dense<0.000000e+00> : vector<8xf32>
    %4 = vector.multi_reduction <add>, %3, %cst_4 [0] : vector<64x8xf32> to vector<8xf32>
    %5 = vector.shape_cast %4 : vector<8xf32> to vector<1x8xf32>
    %cst_5 = arith.constant 1.562500e-02 : f32
    %6 = vector.broadcast %cst_5 : f32 to vector<1x8xf32>
    %7 = arith.mulf %5, %6 : vector<1x8xf32>
    %8 = vector.broadcast %7 : vector<1x8xf32> to vector<64x8xf32>
    %9 = arith.subf %3, %8 : vector<64x8xf32>
    %10 = arith.mulf %9, %9 : vector<64x8xf32>
    %cst_6 = arith.constant dense<0.000000e+00> : vector<8xf32>
    %11 = vector.multi_reduction <add>, %10, %cst_6 [0] : vector<64x8xf32> to vector<8xf32>
    %12 = vector.shape_cast %11 : vector<8xf32> to vector<1x8xf32>
    %cst_7 = arith.constant 1.562500e-02 : f32
    %13 = vector.broadcast %cst_7 : f32 to vector<1x8xf32>
    %14 = arith.mulf %12, %13 : vector<1x8xf32>
    %cst_8 = arith.constant 9.99999974E-6 : f32
    %15 = vector.broadcast %cst_8 : f32 to vector<1x8xf32>
    %16 = arith.addf %14, %15 : vector<1x8xf32>
    %17 = math.rsqrt %16 : vector<1x8xf32>
    %18 = vector.broadcast %17 : vector<1x8xf32> to vector<64x8xf32>
    %19 = arith.mulf %9, %18 : vector<64x8xf32>
    %cst_9 = arith.constant 0.000000e+00 : f32
    %20 = vector.broadcast %cst_9 : f32 to vector<64x8xf32>
    %21 = arith.cmpf oge, %19, %20 : vector<64x8xf32>
    %cst_10 = arith.constant 0.00999999977 : f32
    %22 = vector.broadcast %cst_10 : f32 to vector<64x8xf32>
    %23 = arith.mulf %22, %19 : vector<64x8xf32>
    %24 = arith.select %21, %19, %23 : vector<64x8xi1>, vector<64x8xf32>
    %cst_11 = arith.constant 0.000000e+00 : f32
    %25 = vector.broadcast %cst_11 : f32 to vector<10x10x8xf32>
    %c0_12 = arith.constant 0 : index
    %c0_13 = arith.constant 0 : index
    %c0_14 = arith.constant 0 : index
    %26 = vector.load %arg5[%c0_12, %c0_13, %c0_14] : memref<10x10x8xf32, #tpu.memory_space<vmem>>, vector<10x10x8xf32>
    tpu.vector_store %arg5[%c0_12, %c0_13, %c0_14], %25 {strides = array<i32>} : memref<10x10x8xf32, #tpu.memory_space<vmem>>, vector<10x10x8xf32>,
    %27 = vector.shape_cast %24 : vector<64x8xf32> to vector<8x8x8xf32>
    %c1 = arith.constant 1 : index
    %c1_15 = arith.constant 1 : index
    %c0_16 = arith.constant 0 : index
    %28 = vector.load %arg5[%c1, %c1_15, %c0_16] : memref<10x10x8xf32, #tpu.memory_space<vmem>>, vector<8x8x8xf32>
    tpu.vector_store %arg5[%c1, %c1_15, %c0_16], %27 {strides = array<i32>} : memref<10x10x8xf32, #tpu.memory_space<vmem>>, vector<8x8x8xf32>,
    %c0_17 = arith.constant 0 : index
    %c0_18 = arith.constant 0 : index
    %c0_19 = arith.constant 0 : index
    %29 = vector.load %arg5[%c0_17, %c0_18, %c0_19] : memref<10x10x8xf32, #tpu.memory_space<vmem>>, vector<8x8x8xf32>
    %c0_20 = arith.constant 0 : index
    %c0_21 = arith.constant 0 : index
    %c0_22 = arith.constant 0 : index
    %30 = vector.load %arg6[%c0_20, %c0_21, %c0_22] : memref<8x8x72xf32, #tpu.memory_space<vmem>>, vector<8x8x8xf32>
    tpu.vector_store %arg6[%c0_20, %c0_21, %c0_22], %29 {strides = array<i32>} : memref<8x8x72xf32, #tpu.memory_space<vmem>>, vector<8x8x8xf32>,
    %c0_23 = arith.constant 0 : index
    %c1_24 = arith.constant 1 : index
    %c0_25 = arith.constant 0 : index
    %31 = vector.load %arg5[%c0_23, %c1_24, %c0_25] : memref<10x10x8xf32, #tpu.memory_space<vmem>>, vector<8x8x8xf32>
    %c0_26 = arith.constant 0 : index
    %c0_27 = arith.constant 0 : index
    %c8 = arith.constant 8 : index
    %32 = vector.load %arg6[%c0_26, %c0_27, %c8] : memref<8x8x72xf32, #tpu.memory_space<vmem>>, vector<8x8x8xf32>
    tpu.vector_store %arg6[%c0_26, %c0_27, %c8], %31 {strides = array<i32>} : memref<8x8x72xf32, #tpu.memory_space<vmem>>, vector<8x8x8xf32>,
    %c0_28 = arith.constant 0 : index
    %c2 = arith.constant 2 : index
    %c0_29 = arith.constant 0 : index
    %33 = vector.load %arg5[%c0_28, %c2, %c0_29] : memref<10x10x8xf32, #tpu.memory_space<vmem>>, vector<8x8x8xf32>
    %c0_30 = arith.constant 0 : index
    %c0_31 = arith.constant 0 : index
    %c16 = arith.constant 16 : index
    %34 = vector.load %arg6[%c0_30, %c0_31, %c16] : memref<8x8x72xf32, #tpu.memory_space<vmem>>, vector<8x8x8xf32>
    tpu.vector_store %arg6[%c0_30, %c0_31, %c16], %33 {strides = array<i32>} : memref<8x8x72xf32, #tpu.memory_space<vmem>>, vector<8x8x8xf32>,
    %c1_32 = arith.constant 1 : index
    %c0_33 = arith.constant 0 : index
    %c0_34 = arith.constant 0 : index
    %35 = vector.load %arg5[%c1_32, %c0_33, %c0_34] : memref<10x10x8xf32, #tpu.memory_space<vmem>>, vector<8x8x8xf32>
    %c0_35 = arith.constant 0 : index
    %c0_36 = arith.constant 0 : index
    %c24 = arith.constant 24 : index
    %36 = vector.load %arg6[%c0_35, %c0_36, %c24] : memref<8x8x72xf32, #tpu.memory_space<vmem>>, vector<8x8x8xf32>
    tpu.vector_store %arg6[%c0_35, %c0_36, %c24], %35 {strides = array<i32>} : memref<8x8x72xf32, #tpu.memory_space<vmem>>, vector<8x8x8xf32>,
    %c1_37 = arith.constant 1 : index
    %c1_38 = arith.constant 1 : index
    %c0_39 = arith.constant 0 : index
    %37 = vector.load %arg5[%c1_37, %c1_38, %c0_39] : memref<10x10x8xf32, #tpu.memory_space<vmem>>, vector<8x8x8xf32>
    %c0_40 = arith.constant 0 : index
    %c0_41 = arith.constant 0 : index
    %c32 = arith.constant 32 : index
    %38 = vector.load %arg6[%c0_40, %c0_41, %c32] : memref<8x8x72xf32, #tpu.memory_space<vmem>>, vector<8x8x8xf32>
    tpu.vector_store %arg6[%c0_40, %c0_41, %c32], %37 {strides = array<i32>} : memref<8x8x72xf32, #tpu.memory_space<vmem>>, vector<8x8x8xf32>,
    %c1_42 = arith.constant 1 : index
    %c2_43 = arith.constant 2 : index
    %c0_44 = arith.constant 0 : index
    %39 = vector.load %arg5[%c1_42, %c2_43, %c0_44] : memref<10x10x8xf32, #tpu.memory_space<vmem>>, vector<8x8x8xf32>
    %c0_45 = arith.constant 0 : index
    %c0_46 = arith.constant 0 : index
    %c40 = arith.constant 40 : index
    %40 = vector.load %arg6[%c0_45, %c0_46, %c40] : memref<8x8x72xf32, #tpu.memory_space<vmem>>, vector<8x8x8xf32>
    tpu.vector_store %arg6[%c0_45, %c0_46, %c40], %39 {strides = array<i32>} : memref<8x8x72xf32, #tpu.memory_space<vmem>>, vector<8x8x8xf32>,
    %c2_47 = arith.constant 2 : index
    %c0_48 = arith.constant 0 : index
    %c0_49 = arith.constant 0 : index
    %41 = vector.load %arg5[%c2_47, %c0_48, %c0_49] : memref<10x10x8xf32, #tpu.memory_space<vmem>>, vector<8x8x8xf32>
    %c0_50 = arith.constant 0 : index
    %c0_51 = arith.constant 0 : index
    %c48 = arith.constant 48 : index
    %42 = vector.load %arg6[%c0_50, %c0_51, %c48] : memref<8x8x72xf32, #tpu.memory_space<vmem>>, vector<8x8x8xf32>
    tpu.vector_store %arg6[%c0_50, %c0_51, %c48], %41 {strides = array<i32>} : memref<8x8x72xf32, #tpu.memory_space<vmem>>, vector<8x8x8xf32>,
    %c2_52 = arith.constant 2 : index
    %c1_53 = arith.constant 1 : index
    %c0_54 = arith.constant 0 : index
    %43 = vector.load %arg5[%c2_52, %c1_53, %c0_54] : memref<10x10x8xf32, #tpu.memory_space<vmem>>, vector<8x8x8xf32>
    %c0_55 = arith.constant 0 : index
    %c0_56 = arith.constant 0 : index
    %c56 = arith.constant 56 : index
    %44 = vector.load %arg6[%c0_55, %c0_56, %c56] : memref<8x8x72xf32, #tpu.memory_space<vmem>>, vector<8x8x8xf32>
    tpu.vector_store %arg6[%c0_55, %c0_56, %c56], %43 {strides = array<i32>} : memref<8x8x72xf32, #tpu.memory_space<vmem>>, vector<8x8x8xf32>,
    %c2_57 = arith.constant 2 : index
    %c2_58 = arith.constant 2 : index
    %c0_59 = arith.constant 0 : index
    %45 = vector.load %arg5[%c2_57, %c2_58, %c0_59] : memref<10x10x8xf32, #tpu.memory_space<vmem>>, vector<8x8x8xf32>
    %c0_60 = arith.constant 0 : index
    %c0_61 = arith.constant 0 : index
    %c64 = arith.constant 64 : index
    %46 = vector.load %arg6[%c0_60, %c0_61, %c64] : memref<8x8x72xf32, #tpu.memory_space<vmem>>, vector<8x8x8xf32>
    tpu.vector_store %arg6[%c0_60, %c0_61, %c64], %45 {strides = array<i32>} : memref<8x8x72xf32, #tpu.memory_space<vmem>>, vector<8x8x8xf32>,
    %c0_62 = arith.constant 0 : index
    %c0_63 = arith.constant 0 : index
    %c0_64 = arith.constant 0 : index
    %47 = vector.load %arg6[%c0_62, %c0_63, %c0_64] : memref<8x8x72xf32, #tpu.memory_space<vmem>>, vector<8x8x72xf32>
    %48 = vector.shape_cast %47 : vector<8x8x72xf32> to vector<64x72xf32>
    %49 = arith.truncf %48 : vector<64x72xf32> to vector<64x72xbf16>
    %c0_65 = arith.constant 0 : index
    %c0_66 = arith.constant 0 : index
    %50 = vector.load %arg3[%c0_65, %c0_66] : memref<72x8xbf16, #tpu.memory_space<vmem>>, vector<72x8xbf16>
    %cst_67 = arith.constant dense<0.000000e+00> : vector<64x8xf32>
    %51 = tpu.matmul %49, %50, %cst_67 {dimension_numbers = #tpu.dot_dimension_numbers<[1], [0], [0], [1], [0, 0, 1, 1], [], []>} : vector<64x72xbf16>, vector<72x8xbf16>, vector<64x8xf32> -> vector<64x8xf32>
    %cst_68 = arith.constant dense<0.000000e+00> : vector<8xf32>
    %52 = vector.multi_reduction <add>, %51, %cst_68 [0] : vector<64x8xf32> to vector<8xf32>
    %53 = vector.shape_cast %52 : vector<8xf32> to vector<1x8xf32>
    %cst_69 = arith.constant 1.562500e-02 : f32
    %54 = vector.broadcast %cst_69 : f32 to vector<1x8xf32>
    %55 = arith.mulf %53, %54 : vector<1x8xf32>
    %56 = vector.broadcast %55 : vector<1x8xf32> to vector<64x8xf32>
    %57 = arith.subf %51, %56 : vector<64x8xf32>
    %58 = arith.mulf %57, %57 : vector<64x8xf32>
    %cst_70 = arith.constant dense<0.000000e+00> : vector<8xf32>
    %59 = vector.multi_reduction <add>, %58, %cst_70 [0] : vector<64x8xf32> to vector<8xf32>
    %60 = vector.shape_cast %59 : vector<8xf32> to vector<1x8xf32>
    %cst_71 = arith.constant 1.562500e-02 : f32
    %61 = vector.broadcast %cst_71 : f32 to vector<1x8xf32>
    %62 = arith.mulf %60, %61 : vector<1x8xf32>
    %cst_72 = arith.constant 9.99999974E-6 : f32
    %63 = vector.broadcast %cst_72 : f32 to vector<1x8xf32>
    %64 = arith.addf %62, %63 : vector<1x8xf32>
    %65 = math.rsqrt %64 : vector<1x8xf32>
    %66 = vector.broadcast %65 : vector<1x8xf32> to vector<64x8xf32>
    %67 = arith.mulf %57, %66 : vector<64x8xf32>
    %cst_73 = arith.constant 0.000000e+00 : f32
    %68 = vector.broadcast %cst_73 : f32 to vector<64x8xf32>
    %69 = arith.cmpf oge, %67, %68 : vector<64x8xf32>
    %cst_74 = arith.constant 0.00999999977 : f32
    %70 = vector.broadcast %cst_74 : f32 to vector<64x8xf32>
    %71 = arith.mulf %70, %67 : vector<64x8xf32>
    %72 = arith.select %69, %67, %71 : vector<64x8xi1>, vector<64x8xf32>
    %c0_75 = arith.constant 0 : index
    %c0_76 = arith.constant 0 : index
    %c0_77 = arith.constant 0 : index
    %73 = vector.load %arg4[%c0_75, %c0_76, %c0_77] : memref<1x64x8xf32, #tpu.memory_space<vmem>>, vector<1x64x8xf32>
    %74 = vector.shape_cast %73 : vector<1x64x8xf32> to vector<64x8xf32>
    %75 = vector.shape_cast %72 : vector<64x8xf32> to vector<1x64x8xf32>
    tpu.vector_store %arg4[%c0_75, %c0_76, %c0_77], %75 {strides = array<i32>} : memref<1x64x8xf32, #tpu.memory_space<vmem>>, vector<1x64x8xf32>,
    return
  }
  func.func @transform_0(%arg0: i32) -> (i32, i32, i32) {
    %c0_i32 = arith.constant 0 : i32
    %c0_i32_0 = arith.constant 0 : i32
    %c0_i32_1 = arith.constant 0 : i32
    return %arg0, %c0_i32, %c0_i32_0 : i32, i32, i32
  }
  func.func @transform_1(%arg0: i32) -> (i32, i32) {
    %c0_i32 = arith.constant 0 : i32
    %c0_i32_0 = arith.constant 0 : i32
    %c0_i32_1 = arith.constant 0 : i32
    return %c0_i32, %c0_i32_0 : i32, i32
  }
  func.func @transform_2(%arg0: i32) -> (i32, i32) {
    %c0_i32 = arith.constant 0 : i32
    %c0_i32_0 = arith.constant 0 : i32
    %c0_i32_1 = arith.constant 0 : i32
    return %c0_i32, %c0_i32_0 : i32, i32
  }
  func.func @transform_3(%arg0: i32) -> (i32, i32, i32) {
    %c0_i32 = arith.constant 0 : i32
    %c0_i32_0 = arith.constant 0 : i32
    %c0_i32_1 = arith.constant 0 : i32
    return %arg0, %c0_i32, %c0_i32_0 : i32, i32, i32
  }
}

</mosaic_0001>

<llo_original>
// kernel: down_conv.1
$region0: #{down_conv.1}
  #allocation0 [shape = 'u32[]', space=smem, size = 0x4, offset = 0x4, fixed_abs, tag = 'smem constant byte address 0x4 - core index']
  #allocation1 [shape = 'u32[144,128]{1,0:T(1,128)}', space=vmem, size = 0x12000, scoped, tag = 'internal scratch']
  #allocation2 [shape = 'f32[10,10,8]{2,1,0:T(8,128)}', space=vmem, size = 0x14000, scoped, tag = 'scratch operand']
  #allocation3 [shape = 'f32[8,8,72]{2,1,0:T(8,128)}', space=vmem, size = 0x8000, scoped, tag = 'scratch operand']
  %s0 = inlined_call_operand.vmem [shape: bf16[2,64,36], index: 0, kind: input, shape index: {}]
  %s1 = inlined_call_operand.vmem [shape: bf16[36,8], index: 1, kind: input, shape index: {}]
  %s2 = inlined_call_operand.vmem [shape: bf16[72,8], index: 2, kind: input, shape index: {}]
  %s3 = inlined_call_operand.vmem [shape: f32[2,64,8], index: 3, kind: output, shape index: {}]
  %s4 = sld [smem:[#allocation0]]
  $region45: #{down_conv.1} parent=0
    _
  %s6 = ssub.s32 1, %s4
  %s7 = scalar_select 0, %s6, %s4
  loop: start=0, step=1, limit=4
  $region2: #{down_conv.1} parent=0 // loop_pre_header
    _
  $region3: #{down_conv.1} parent=0 // loop_header
    %s9 = sphi 0, %s13
    %p10 = scmp.ge.s32.totalorder %s9, 4
    %s19 = sphi 0, %s21
    %s22 = sphi 0, %s19
    %s23 = sphi 0, %s22
    %s39 = sphi 0, %s23
    %s43 = sphi 0, %s43
    %s45 = sphi 0, %s43
    %s46 = sphi 0, %s45
    %s60 = sphi 0, %s46
    %s64 = sphi 0, %s64
    %s66 = sphi 0, %s64
    %s67 = sphi 0, %s66
    %s81 = sphi 0, %s67
    %s87 = sphi 0, %s89
    %s90 = sphi 0, %s87
    %s91 = sphi 0, %s90
    %s107 = sphi 0, %s91
  $region4: #{down_conv.1} parent=0 // loop_header_branch
    %12 = sbr.rel (%p10) target = $region8
  $region5: #{down_conv.1} parent=0 // loop_body
    %s14 = ssub.s32 %s9, 1
    %s15 = ssub.s32 %s9, 2
    %s16 = sadd.s32 %s9, 1
    %s17 = ssub.s32 %s9, %s16
    %p18 = scmp.eq.s32.totalorder %s17, 0
    %s20 = sadd.s32 %s19, 1
    %s21 = scalar_select %p18, %s19, %s20
    %p24 = pneg %p18
    %p25 = scmp.eq.s32.totalorder %s9, 1
    %p26 = por %p24, %p25
    %p27 = scmp.ne.s32.totalorder %s19, %s22
    %p28 = scmp.eq.s32.totalorder %s9, 0
    %p29 = por %p27, %p28
    %p30 = scmp.ne.s32.totalorder %s19, %s22
    %p31 = scmp.eq.s32.totalorder %s14, 1
    %p32 = por %p30, %p31
    %p33 = scmp.ne.s32.totalorder %s22, %s23
    %p34 = scmp.eq.s32.totalorder %s14, 0
    %p35 = por %p33, %p34
    %p36 = scmp.ne.s32.totalorder %s22, %s23
    %p37 = scmp.eq.s32.totalorder %s15, 1
    %p38 = por %p36, %p37
    %p40 = scmp.ne.s32.totalorder %s23, %s39
    %p41 = scmp.eq.s32.totalorder %s15, 0
    %p42 = por %p40, %p41
    %s44 = sadd.s32 %s43, 1
    %p47 = scmp.eq.s32.totalorder %s9, 1
    %p48 = scmp.ne.s32.totalorder %s43, %s45
    %p49 = scmp.eq.s32.totalorder %s9, 0
    %p50 = por %p48, %p49
    %p51 = scmp.ne.s32.totalorder %s43, %s45
    %p52 = scmp.eq.s32.totalorder %s14, 1
    %p53 = por %p51, %p52
    %p54 = scmp.ne.s32.totalorder %s45, %s46
    %p55 = scmp.eq.s32.totalorder %s14, 0
    %p56 = por %p54, %p55
    %p57 = scmp.ne.s32.totalorder %s45, %s46
    %p58 = scmp.eq.s32.totalorder %s15, 1
    %p59 = por %p57, %p58
    %p61 = scmp.ne.s32.totalorder %s46, %s60
    %p62 = scmp.eq.s32.totalorder %s15, 0
    %p63 = por %p61, %p62
    %s65 = sadd.s32 %s64, 1
    %p68 = scmp.eq.s32.totalorder %s9, 1
    %p69 = scmp.ne.s32.totalorder %s64, %s66
    %p70 = scmp.eq.s32.totalorder %s9, 0
    %p71 = por %p69, %p70
    %p72 = scmp.ne.s32.totalorder %s64, %s66
    %p73 = scmp.eq.s32.totalorder %s14, 1
    %p74 = por %p72, %p73
    %p75 = scmp.ne.s32.totalorder %s66, %s67
    %p76 = scmp.eq.s32.totalorder %s14, 0
    %p77 = por %p75, %p76
    %p78 = scmp.ne.s32.totalorder %s66, %s67
    %p79 = scmp.eq.s32.totalorder %s15, 1
    %p80 = por %p78, %p79
    %p82 = scmp.ne.s32.totalorder %s67, %s81
    %p83 = scmp.eq.s32.totalorder %s15, 0
    %p84 = por %p82, %p83
    %s85 = ssub.s32 %s9, %s16
    %p86 = scmp.eq.s32.totalorder %s85, 0
    %s88 = sadd.s32 %s87, 1
    %s89 = scalar_select %p86, %s87, %s88
    %p92 = pneg %p86
    %p93 = scmp.eq.s32.totalorder %s9, 1
    %p94 = por %p92, %p93
    %p95 = scmp.ne.s32.totalorder %s87, %s90
    %p96 = scmp.eq.s32.totalorder %s9, 0
    %p97 = por %p95, %p96
    %p98 = scmp.ne.s32.totalorder %s87, %s90
    %p99 = scmp.eq.s32.totalorder %s14, 1
    %p100 = por %p98, %p99
    %p101 = scmp.ne.s32.totalorder %s90, %s91
    %p102 = scmp.eq.s32.totalorder %s14, 0
    %p103 = por %p101, %p102
    %p104 = scmp.ne.s32.totalorder %s90, %s91
    %p105 = scmp.eq.s32.totalorder %s15, 1
    %p106 = por %p104, %p105
    %p108 = scmp.ne.s32.totalorder %s91, %s107
    %p109 = scmp.eq.s32.totalorder %s15, 0
    %p110 = por %p108, %p109
    %p111 = scmp.le.s32.totalorder 1, %s9
    %p112 = scmp.lt.s32.totalorder %s9, 3
    %p113 = pnand %p111, %p112
    %p114 = pneg %p113
    // Predicated region
    $region9: #{down_conv.1} parent=5 // pred_check
      _
    $region10: #{down_conv.1} parent=5 // pred_check_branch
      %116 = sbr.rel (%p113) target = $region12
    $region11: #{down_conv.1} parent=5 // pred_region
      %s117 = ssub.s32 %s9, 1
      // Predicated region
      $region13: #{down_conv.1} parent=11 // pred_check
        %p118 = pneg %p56
      $region14: #{down_conv.1} parent=11 // pred_check_branch
        %120 = sbr.rel (%p118) target = $region16
      $region15: #{down_conv.1} parent=11 // pred_region
        _
      $region16: #{down_conv.1} parent=11 // pred_fallthru
        _
      // Predicated region
      $region17: #{down_conv.1} parent=11 // pred_check
        %p121 = pneg %p77
      $region18: #{down_conv.1} parent=11 // pred_check_branch
        %123 = sbr.rel (%p121) target = $region20
      $region19: #{down_conv.1} parent=11 // pred_region
        _
      $region20: #{down_conv.1} parent=11 // pred_fallthru
        _
    $region12: #{down_conv.1} parent=5 // pred_fallthru
      _
    %p124 = scmp.lt.s32.totalorder %s9, 2
    // Predicated region
    $region21: #{down_conv.1} parent=5 // pred_check
      %p125 = pneg %p124
    $region22: #{down_conv.1} parent=5 // pred_check_branch
      %127 = sbr.rel (%p125) target = $region24
    $region23: #{down_conv.1} parent=5 // pred_region
      // Predicated region
      $region25: #{down_conv.1} parent=23 // pred_check
        %p128 = pneg %p29
      $region26: #{down_conv.1} parent=23 // pred_check_branch
        %130 = sbr.rel (%p128) target = $region28
      $region27: #{down_conv.1} parent=23 // pred_region
        %p131 = scmp.lt.s32.totalorder %s9, 1
        %s132 = scalar_select %p131, %s9, 1
        %s133 = smul.addr %s132, 8
        %s134 = smul.addr %s133, 4
        %s135 = scalar_lea.vmem %s0, %s134
      $region28: #{down_conv.1} parent=23 // pred_fallthru
        _
    $region24: #{down_conv.1} parent=5 // pred_fallthru
      _
    %p136 = scmp.le.s32.totalorder 1, %s9
    %p137 = scmp.lt.s32.totalorder %s9, 3
    %p138 = pnand %p136, %p137
    %p139 = pneg %p138
    // Predicated region
    $region29: #{down_conv.1} parent=5 // pred_check
      _
    $region30: #{down_conv.1} parent=5 // pred_check_branch
      %141 = sbr.rel (%p138) target = $region32
    $region31: #{down_conv.1} parent=5 // pred_region
      %s142 = ssub.s32 %s9, 1
      %p143 = scmp.lt.s32.totalorder %s14, 1
      %s144 = scalar_select %p143, %s14, 1
      %s145 = smul.addr %s144, 8
      %s146 = smul.addr %s145, 4
      %s147 = scalar_lea.vmem %s0, %s146
      %p148 = pneg %p35
      %p149 = pneg %p32
      %p150 = pneg %p56
      %p151 = pneg %p53
      %p152 = pneg %p77
      %p153 = pneg %p74
      %p154 = pneg %p103
      %p155 = pneg %p100
      %p156 = scmp.lt.s32.totalorder %s14, 1
      %s157 = scalar_select %p156, %s14, 1
      %s158 = smul.addr %s157, 8
      %s159 = smul.addr %s158, 8
      %s160 = scalar_lea.vmem %s3, %s159
      %p161 = scmp.lt.s32.totalorder %s14, 1
      %s162 = scalar_select %p161, %s14, 1
      %s163 = smul.addr %s162, 8
      %s164 = smul.addr %s163, 4
      %s165 = scalar_lea.vmem %s0, %s164
      %p166 = scmp.lt.s32.totalorder %s14, 1
      %s167 = scalar_select %p166, %s14, 1
      %s168 = smul.addr %s167, 8
      %s169 = smul.addr %s168, 8
      %s170 = scalar_lea.vmem %s3, %s169
      %v172 = vld [vmem:[%s165] sm:$0xf]
      %v173 = vld [vmem:[%s165 + $0x4] sm:$0xf]
      %v174 = vld [vmem:[%s165 + $0x8] sm:$0xf]
      %v175 = vld [vmem:[%s165 + $0xc] sm:$0xf]
      %v176 = vld [vmem:[%s165 + $0x10] sm:$0xf]
      %v177 = vld [vmem:[%s165 + $0x14] sm:$0xf]
      %v178 = vld [vmem:[%s165 + $0x18] sm:$0xf]
      %v179 = vld [vmem:[%s165 + $0x1c] sm:$0xf]
      %v180 = vld [vmem:[%s1] sm:$0xf]
      %v181 = vld [vmem:[%s1 + $0x4] sm:$0xf]
      %v182 = vld [vmem:[%s1 + $0x8] sm:$0xf]
      %v183 = vld [vmem:[%s1 + $0xc] sm:$0xf]
      %v184 = vld [vmem:[%s1 + $0x10] sm:$0x3]
      %v193 = vunpack.c.l.b16 %v172
      %v194 = vunpack.c.l.b16 %v173
      %v195 = vunpack.c.l.b16 %v174
      %v196 = vunpack.c.l.b16 %v175
      %v197 = vunpack.c.l.b16 %v176
      %v198 = vunpack.c.l.b16 %v177
      %v199 = vunpack.c.l.b16 %v178
      %v200 = vunpack.c.l.b16 %v179
      %v201 = vpack.c.b16 %v194, %v193
      %v202 = vpack.c.b16 %v196, %v195
      %v203 = vpack.c.b16 %v198, %v197
      %v204 = vpack.c.b16 %v200, %v199
      %v210 = vunpack.c.l.b16 %v180
      %v211 = vunpack.c.l.b16 %v181
      %v212 = vunpack.c.l.b16 %v182
      %v213 = vunpack.c.l.b16 %v183
      %v214 = vunpack.c.l.b16 %v184
      %v215 = vpack.c.b16 %v211, %v210
      %v216 = vpack.c.b16 %v213, %v212
      %v217 = vpack.c.b16 %v214, %v214
      %vm220 = vcmask 293888
      %v222 = vsel %vm220, %v201, 0
      %v225 = vsel %vm220, %v202, 0
      %v228 = vsel %vm220, %v203, 0
      %v231 = vsel %vm220, %v204, 0
      %vm233 = vcmask 1041408
      %v235 = vsel %vm233, %v217, 0
      %237 = vmatprep.subr.bf16.mxu0 0
      %238 = vmatpush1.bf16.msra.mxu0 0
      %239 = vmatprep.subr.bf16.mxu0 0
      %240 = vmatpush1.bf16.msra.mxu0 0
      %241 = vmatprep.subr.bf16.mxu0 0
      %242 = vmatpush1.bf16.msra.mxu0 0
      %243 = vmatprep.subr.bf16.mxu0 0
      %244 = vmatpush1.bf16.msra.mxu0 0
      %245 = vmatprep.subr.bf16.mxu0 0
      %246 = vmatpush1.bf16.msra.mxu0 0
      %247 = vmatprep.subr.bf16.mxu0 0
      %248 = vmatpush1.bf16.msra.mxu0 %v235
      %249 = vmatprep.subr.bf16.mxu0 0
      %250 = vmatpush1.bf16.msra.mxu0 %v216
      %251 = vmatprep.subr.bf16.mxu0 0
      %252 = vmatpush1.bf16.msra.mxu0 %v215
      %253 = vmatprep.subr.bf16.mxu0 0
      %254 = vmatpush2.bf16.msra.mxu0 0
      %255 = vmatprep.subr.bf16.mxu0 0
      %256 = vmatpush2.bf16.msra.mxu0 0
      %257 = vmatprep.subr.bf16.mxu0 0
      %258 = vmatpush2.bf16.msra.mxu0 0
      %259 = vmatprep.subr.bf16.mxu0 0
      %260 = vmatpush2.bf16.msra.mxu0 0
      %261 = vmatprep.subr.bf16.mxu0 0
      %262 = vmatpush2.bf16.msra.mxu0 0
      %263 = vmatprep.subr.bf16.mxu0 0
      %264 = vmatpush2.bf16.msra.mxu0 0
      %265 = vmatprep.subr.bf16.mxu0 0
      %266 = vmatpush2.bf16.msra.mxu0 0
      %267 = vmatprep.subr.bf16.mxu0 0
      %268 = vmatpush2.bf16.msra.mxu0 0
      %269 = vmatprep.mubr.bf16.mxu0 0
      %270 = vmatmul.mubr.bf16.gmra.mxu0 %v222
      %v271 = vpop.f32.mrf.mxu0
      %v272 = vadd.f32 0.0, %v271
      %v273 = vpop.f32.mrf.mxu0
      %v274 = vpop.f32.mrf.mxu0
      %v275 = vadd.f32 0.0, %v274
      %v276 = vpop.f32.mrf.mxu0
      %277 = vmatprep.mubr.bf16.mxu0 0
      %278 = vmatmul.mubr.bf16.gmra.mxu0 %v225
      %v279 = vpop.f32.mrf.mxu0
      %v280 = vadd.f32 0.0, %v279
      %v281 = vpop.f32.mrf.mxu0
      %v282 = vpop.f32.mrf.mxu0
      %v283 = vadd.f32 0.0, %v282
      %v284 = vpop.f32.mrf.mxu0
      %285 = vmatprep.mubr.bf16.mxu0 0
      %286 = vmatmul.mubr.bf16.gmra.mxu0 %v228
      %v287 = vpop.f32.mrf.mxu0
      %v288 = vadd.f32 0.0, %v287
      %v289 = vpop.f32.mrf.mxu0
      %v290 = vpop.f32.mrf.mxu0
      %v291 = vadd.f32 0.0, %v290
      %v292 = vpop.f32.mrf.mxu0
      %293 = vmatprep.mubr.bf16.mxu0 0
      %294 = vmatmul.mubr.bf16.gmra.mxu0 %v231
      %v295 = vpop.f32.mrf.mxu0
      %v296 = vadd.f32 0.0, %v295
      %v297 = vpop.f32.mrf.mxu0
      %v298 = vpop.f32.mrf.mxu0
      %v299 = vadd.f32 0.0, %v298
      %v300 = vpop.f32.mrf.mxu0
      %301 = vdwg.mxu0
      %vm302 = vcmask 64512
      %v303 = vsel %vm302, %v272, 0.0
      %v304 = vsel %vm302, %v275, 0.0
      %v305 = vadd.f32 %v303, %v304
      %v306 = vsel %vm302, %v280, 0.0
      %v307 = vadd.f32 %v305, %v306
      %v308 = vsel %vm302, %v283, 0.0
      %v309 = vadd.f32 %v307, %v308
      %v310 = vsel %vm302, %v288, 0.0
      %v311 = vadd.f32 %v309, %v310
      %v312 = vsel %vm302, %v291, 0.0
      %v313 = vadd.f32 %v311, %v312
      %v314 = vsel %vm302, %v296, 0.0
      %v315 = vadd.f32 %v313, %v314
      %v316 = vsel %vm302, %v299, 0.0
      %v317 = vadd.f32 %v315, %v316
      %v318 = vrot.slane %v317, 4
      %v319 = vadd.f32 %v317, %v318
      %v320 = vrot.slane %v319, 2
      %v321 = vadd.f32 %v319, %v320
      %v322 = vrot.slane %v321, 1
      %v323 = vadd.f32 %v321, %v322
      %v324 = vmul.f32 %v323, 0.015625
      %v325 = vsub.f32 %v272, %v324
      %v326 = vsub.f32 %v275, %v324
      %v327 = vsub.f32 %v280, %v324
      %v328 = vsub.f32 %v283, %v324
      %v329 = vsub.f32 %v288, %v324
      %v330 = vsub.f32 %v291, %v324
      %v331 = vsub.f32 %v296, %v324
      %v332 = vsub.f32 %v299, %v324
      %v333 = vmul.f32 %v325, %v325
      %v334 = vmul.f32 %v326, %v326
      %v335 = vmul.f32 %v327, %v327
      %v336 = vmul.f32 %v328, %v328
      %v337 = vmul.f32 %v329, %v329
      %v338 = vmul.f32 %v330, %v330
      %v339 = vmul.f32 %v331, %v331
      %v340 = vmul.f32 %v332, %v332
      %v341 = vsel %vm302, %v333, 0.0
      %v342 = vsel %vm302, %v334, 0.0
      %v343 = vadd.f32 %v341, %v342
      %v344 = vsel %vm302, %v335, 0.0
      %v345 = vadd.f32 %v343, %v344
      %v346 = vsel %vm302, %v336, 0.0
      %v347 = vadd.f32 %v345, %v346
      %v348 = vsel %vm302, %v337, 0.0
      %v349 = vadd.f32 %v347, %v348
      %v350 = vsel %vm302, %v338, 0.0
      %v351 = vadd.f32 %v349, %v350
      %v352 = vsel %vm302, %v339, 0.0
      %v353 = vadd.f32 %v351, %v352
      %v354 = vsel %vm302, %v340, 0.0
      %v355 = vadd.f32 %v353, %v354
      %v356 = vrot.slane %v355, 4
      %v357 = vadd.f32 %v355, %v356
      %v358 = vrot.slane %v357, 2
      %v359 = vadd.f32 %v357, %v358
      %v360 = vrot.slane %v359, 1
      %v361 = vadd.f32 %v359, %v360
      %v362 = vmul.f32 %v361, 0.015625
      %v363 = vadd.f32 %v362, 1e-05
      %v364 = vrsqrt.pop %v363
      %v365 = vmul.f32 %v325, %v364
      %v366 = vmul.f32 %v326, %v364
      %v367 = vmul.f32 %v327, %v364
      %v368 = vmul.f32 %v328, %v364
      %v369 = vmul.f32 %v329, %v364
      %v370 = vmul.f32 %v330, %v364
      %v371 = vmul.f32 %v331, %v364
      %v372 = vmul.f32 %v332, %v364
      %vm373 = vcmp.ge.f32.partialorder %v365, 0.0
      %vm374 = vcmp.ge.f32.partialorder %v366, 0.0
      %vm375 = vcmp.ge.f32.partialorder %v367, 0.0
      %vm376 = vcmp.ge.f32.partialorder %v368, 0.0
      %vm377 = vcmp.ge.f32.partialorder %v369, 0.0
      %vm378 = vcmp.ge.f32.partialorder %v370, 0.0
      %vm379 = vcmp.ge.f32.partialorder %v371, 0.0
      %vm380 = vcmp.ge.f32.partialorder %v372, 0.0
      %v381 = vmul.f32 %v365, 0.01
      %v382 = vmul.f32 %v366, 0.01
      %v383 = vmul.f32 %v367, 0.01
      %v384 = vmul.f32 %v368, 0.01
      %v385 = vmul.f32 %v369, 0.01
      %v386 = vmul.f32 %v370, 0.01
      %v387 = vmul.f32 %v371, 0.01
      %v388 = vmul.f32 %v372, 0.01
      %v389 = vsel %vm373, %v365, %v381
      %v390 = vsel %vm374, %v366, %v382
      %v391 = vsel %vm375, %v367, %v383
      %v392 = vsel %vm376, %v368, %v384
      %v393 = vsel %vm377, %v369, %v385
      %v394 = vsel %vm378, %v370, %v386
      %v395 = vsel %vm379, %v371, %v387
      %v396 = vsel %vm380, %v372, %v388
      %397 = vst.msk [vmem:[#allocation2] sm:$0xff] %vm302, 0.0
      %vm398 = vcmask 58368
      %399 = vst.msk [vmem:[#allocation2 + $0x8] sm:$0x3] %vm398, 0.0
      %400 = vst.msk [vmem:[#allocation2 + $0x10] sm:$0xff] %vm302, 0.0
      %401 = vst.msk [vmem:[#allocation2 + $0x18] sm:$0x3] %vm398, 0.0
      %402 = vst.msk [vmem:[#allocation2 + $0x20] sm:$0xff] %vm302, 0.0
      %403 = vst.msk [vmem:[#allocation2 + $0x28] sm:$0x3] %vm398, 0.0
      %404 = vst.msk [vmem:[#allocation2 + $0x30] sm:$0xff] %vm302, 0.0
      %405 = vst.msk [vmem:[#allocation2 + $0x38] sm:$0x3] %vm398, 0.0
      %406 = vst.msk [vmem:[#allocation2 + $0x40] sm:$0xff] %vm302, 0.0
      %407 = vst.msk [vmem:[#allocation2 + $0x48] sm:$0x3] %vm398, 0.0
      %408 = vst.msk [vmem:[#allocation2 + $0x50] sm:$0xff] %vm302, 0.0
      %409 = vst.msk [vmem:[#allocation2 + $0x58] sm:$0x3] %vm398, 0.0
      %410 = vst.msk [vmem:[#allocation2 + $0x60] sm:$0xff] %vm302, 0.0
      %411 = vst.msk [vmem:[#allocation2 + $0x68] sm:$0x3] %vm398, 0.0
      %412 = vst.msk [vmem:[#allocation2 + $0x70] sm:$0xff] %vm302, 0.0
      %413 = vst.msk [vmem:[#allocation2 + $0x78] sm:$0x3] %vm398, 0.0
      %414 = vst.msk [vmem:[#allocation2 + $0x80] sm:$0xff] %vm302, 0.0
      %415 = vst.msk [vmem:[#allocation2 + $0x88] sm:$0x3] %vm398, 0.0
      %416 = vst.msk [vmem:[#allocation2 + $0x90] sm:$0xff] %vm302, 0.0
      %417 = vst.msk [vmem:[#allocation2 + $0x98] sm:$0x3] %vm398, 0.0
      %s418 = scalar_lea.vmem [#allocation2], 16
      %419 = vst.msk [vmem:[%s418 + $0x1] sm:$0xff] %vm302, %v389
      %420 = vst.msk [vmem:[%s418 + $0x11] sm:$0xff] %vm302, %v390
      %421 = vst.msk [vmem:[%s418 + $0x21] sm:$0xff] %vm302, %v391
      %422 = vst.msk [vmem:[%s418 + $0x31] sm:$0xff] %vm302, %v392
      %423 = vst.msk [vmem:[%s418 + $0x41] sm:$0xff] %vm302, %v393
      %424 = vst.msk [vmem:[%s418 + $0x51] sm:$0xff] %vm302, %v394
      %425 = vst.msk [vmem:[%s418 + $0x61] sm:$0xff] %vm302, %v395
      %426 = vst.msk [vmem:[%s418 + $0x71] sm:$0xff] %vm302, %v396
      %v427 = vld [vmem:[#allocation2] sm:$0xff]
      %v428 = vld [vmem:[#allocation2 + $0x10] sm:$0xff]
      %v429 = vld [vmem:[#allocation2 + $0x20] sm:$0xff]
      %v430 = vld [vmem:[#allocation2 + $0x30] sm:$0xff]
      %v431 = vld [vmem:[#allocation2 + $0x40] sm:$0xff]
      %v432 = vld [vmem:[#allocation2 + $0x50] sm:$0xff]
      %v433 = vld [vmem:[#allocation2 + $0x60] sm:$0xff]
      %v434 = vld [vmem:[#allocation2 + $0x70] sm:$0xff]
      %435 = vst.msk [vmem:[#allocation3] sm:$0xff] %vm302, %v427
      %436 = vst.msk [vmem:[#allocation3 + $0x8] sm:$0xff] %vm302, %v428
      %437 = vst.msk [vmem:[#allocation3 + $0x10] sm:$0xff] %vm302, %v429
      %438 = vst.msk [vmem:[#allocation3 + $0x18] sm:$0xff] %vm302, %v430
      %439 = vst.msk [vmem:[#allocation3 + $0x20] sm:$0xff] %vm302, %v431
      %440 = vst.msk [vmem:[#allocation3 + $0x28] sm:$0xff] %vm302, %v432
      %441 = vst.msk [vmem:[#allocation3 + $0x30] sm:$0xff] %vm302, %v433
      %442 = vst.msk [vmem:[#allocation3 + $0x38] sm:$0xff] %vm302, %v434
      %v443 = vld [vmem:[#allocation2 + $0x1] sm:$0xff]
      %v444 = vld [vmem:[#allocation2 + $0x11] sm:$0xff]
      %v445 = vld [vmem:[#allocation2 + $0x21] sm:$0xff]
      %v446 = vld [vmem:[#allocation2 + $0x31] sm:$0xff]
      %v447 = vld [vmem:[#allocation2 + $0x41] sm:$0xff]
      %v448 = vld [vmem:[#allocation2 + $0x51] sm:$0xff]
      %v449 = vld [vmem:[#allocation2 + $0x61] sm:$0xff]
      %v450 = vld [vmem:[#allocation2 + $0x71] sm:$0xff]
      %459 = vrot.lane.b32.xlu0 %v443, 8
      %v460 = vpop.permute.xlu0 %459
      %461 = vrot.lane.b32.xlu0 %v444, 8
      %v462 = vpop.permute.xlu0 %461
      %463 = vrot.lane.b32.xlu0 %v445, 8
      %v464 = vpop.permute.xlu0 %463
      %465 = vrot.lane.b32.xlu0 %v446, 8
      %v466 = vpop.permute.xlu0 %465
      %467 = vrot.lane.b32.xlu0 %v447, 8
      %v468 = vpop.permute.xlu0 %467
      %469 = vrot.lane.b32.xlu0 %v448, 8
      %v470 = vpop.permute.xlu0 %469
      %471 = vrot.lane.b32.xlu0 %v449, 8
      %v472 = vpop.permute.xlu0 %471
      %473 = vrot.lane.b32.xlu0 %v450, 8
      %v474 = vpop.permute.xlu0 %473
      %vm483 = vcmask 130112
      %484 = vst.msk [vmem:[#allocation3] sm:$0xff] %vm483, %v460
      %485 = vst.msk [vmem:[#allocation3 + $0x8] sm:$0xff] %vm483, %v462
      %486 = vst.msk [vmem:[#allocation3 + $0x10] sm:$0xff] %vm483, %v464
      %487 = vst.msk [vmem:[#allocation3 + $0x18] sm:$0xff] %vm483, %v466
      %488 = vst.msk [vmem:[#allocation3 + $0x20] sm:$0xff] %vm483, %v468
      %489 = vst.msk [vmem:[#allocation3 + $0x28] sm:$0xff] %vm483, %v470
      %490 = vst.msk [vmem:[#allocation3 + $0x30] sm:$0xff] %vm483, %v472
      %491 = vst.msk [vmem:[#allocation3 + $0x38] sm:$0xff] %vm483, %v474
      %v492 = vld [vmem:[#allocation2 + $0x2] sm:$0xff]
      %v493 = vld [vmem:[#allocation2 + $0x12] sm:$0xff]
      %v494 = vld [vmem:[#allocation2 + $0x22] sm:$0xff]
      %v495 = vld [vmem:[#allocation2 + $0x32] sm:$0xff]
      %v496 = vld [vmem:[#allocation2 + $0x42] sm:$0xff]
      %v497 = vld [vmem:[#allocation2 + $0x52] sm:$0xff]
      %v498 = vld [vmem:[#allocation2 + $0x62] sm:$0xff]
      %v499 = vld [vmem:[#allocation2 + $0x72] sm:$0xff]
      %508 = vrot.lane.b32.xlu0 %v492, 16
      %v509 = vpop.permute.xlu0 %508
      %510 = vrot.lane.b32.xlu0 %v493, 16
      %v511 = vpop.permute.xlu0 %510
      %512 = vrot.lane.b32.xlu0 %v494, 16
      %v513 = vpop.permute.xlu0 %512
      %514 = vrot.lane.b32.xlu0 %v495, 16
      %v515 = vpop.permute.xlu0 %514
      %516 = vrot.lane.b32.xlu0 %v496, 16
      %v517 = vpop.permute.xlu0 %516
      %518 = vrot.lane.b32.xlu0 %v497, 16
      %v519 = vpop.permute.xlu0 %518
      %520 = vrot.lane.b32.xlu0 %v498, 16
      %v521 = vpop.permute.xlu0 %520
      %522 = vrot.lane.b32.xlu0 %v499, 16
      %v523 = vpop.permute.xlu0 %522
      %vm532 = vcmask 195712
      %533 = vst.msk [vmem:[#allocation3] sm:$0xff] %vm532, %v509
      %534 = vst.msk [vmem:[#allocation3 + $0x8] sm:$0xff] %vm532, %v511
      %535 = vst.msk [vmem:[#allocation3 + $0x10] sm:$0xff] %vm532, %v513
      %536 = vst.msk [vmem:[#allocation3 + $0x18] sm:$0xff] %vm532, %v515
      %537 = vst.msk [vmem:[#allocation3 + $0x20] sm:$0xff] %vm532, %v517
      %538 = vst.msk [vmem:[#allocation3 + $0x28] sm:$0xff] %vm532, %v519
      %539 = vst.msk [vmem:[#allocation3 + $0x30] sm:$0xff] %vm532, %v521
      %540 = vst.msk [vmem:[#allocation3 + $0x38] sm:$0xff] %vm532, %v523
      %v541 = vld [vmem:[%s418] sm:$0xff]
      %v542 = vld [vmem:[%s418 + $0x10] sm:$0xff]
      %v543 = vld [vmem:[%s418 + $0x20] sm:$0xff]
      %v544 = vld [vmem:[%s418 + $0x30] sm:$0xff]
      %v545 = vld [vmem:[%s418 + $0x40] sm:$0xff]
      %v546 = vld [vmem:[%s418 + $0x50] sm:$0xff]
      %v547 = vld [vmem:[%s418 + $0x60] sm:$0xff]
      %v548 = vld [vmem:[%s418 + $0x70] sm:$0xff]
      %557 = vrot.lane.b32.xlu0 %v541, 24
      %v558 = vpop.permute.xlu0 %557
      %559 = vrot.lane.b32.xlu0 %v542, 24
      %v560 = vpop.permute.xlu0 %559
      %561 = vrot.lane.b32.xlu0 %v543, 24
      %v562 = vpop.permute.xlu0 %561
      %563 = vrot.lane.b32.xlu0 %v544, 24
      %v564 = vpop.permute.xlu0 %563
      %565 = vrot.lane.b32.xlu0 %v545, 24
      %v566 = vpop.permute.xlu0 %565
      %567 = vrot.lane.b32.xlu0 %v546, 24
      %v568 = vpop.permute.xlu0 %567
      %569 = vrot.lane.b32.xlu0 %v547, 24
      %v570 = vpop.permute.xlu0 %569
      %571 = vrot.lane.b32.xlu0 %v548, 24
      %v572 = vpop.permute.xlu0 %571
      %vm581 = vcmask 261312
      %582 = vst.msk [vmem:[#allocation3] sm:$0xff] %vm581, %v558
      %583 = vst.msk [vmem:[#allocation3 + $0x8] sm:$0xff] %vm581, %v560
      %584 = vst.msk [vmem:[#allocation3 + $0x10] sm:$0xff] %vm581, %v562
      %585 = vst.msk [vmem:[#allocation3 + $0x18] sm:$0xff] %vm581, %v564
      %586 = vst.msk [vmem:[#allocation3 + $0x20] sm:$0xff] %vm581, %v566
      %587 = vst.msk [vmem:[#allocation3 + $0x28] sm:$0xff] %vm581, %v568
      %588 = vst.msk [vmem:[#allocation3 + $0x30] sm:$0xff] %vm581, %v570
      %589 = vst.msk [vmem:[#allocation3 + $0x38] sm:$0xff] %vm581, %v572
      %v590 = vld [vmem:[%s418 + $0x1] sm:$0xff]
      %v591 = vld [vmem:[%s418 + $0x11] sm:$0xff]
      %v592 = vld [vmem:[%s418 + $0x21] sm:$0xff]
      %v593 = vld [vmem:[%s418 + $0x31] sm:$0xff]
      %v594 = vld [vmem:[%s418 + $0x41] sm:$0xff]
      %v595 = vld [vmem:[%s418 + $0x51] sm:$0xff]
      %v596 = vld [vmem:[%s418 + $0x61] sm:$0xff]
      %v597 = vld [vmem:[%s418 + $0x71] sm:$0xff]
      %606 = vrot.lane.b32.xlu0 %v590, 32
      %v607 = vpop.permute.xlu0 %606
      %608 = vrot.lane.b32.xlu0 %v591, 32
      %v609 = vpop.permute.xlu0 %608
      %610 = vrot.lane.b32.xlu0 %v592, 32
      %v611 = vpop.permute.xlu0 %610
      %612 = vrot.lane.b32.xlu0 %v593, 32
      %v613 = vpop.permute.xlu0 %612
      %614 = vrot.lane.b32.xlu0 %v594, 32
      %v615 = vpop.permute.xlu0 %614
      %616 = vrot.lane.b32.xlu0 %v595, 32
      %v617 = vpop.permute.xlu0 %616
      %618 = vrot.lane.b32.xlu0 %v596, 32
      %v619 = vpop.permute.xlu0 %618
      %620 = vrot.lane.b32.xlu0 %v597, 32
      %v621 = vpop.permute.xlu0 %620
      %vm630 = vcmask 326912
      %631 = vst.msk [vmem:[#allocation3] sm:$0xff] %vm630, %v607
      %632 = vst.msk [vmem:[#allocation3 + $0x8] sm:$0xff] %vm630, %v609
      %633 = vst.msk [vmem:[#allocation3 + $0x10] sm:$0xff] %vm630, %v611
      %634 = vst.msk [vmem:[#allocation3 + $0x18] sm:$0xff] %vm630, %v613
      %635 = vst.msk [vmem:[#allocation3 + $0x20] sm:$0xff] %vm630, %v615
      %636 = vst.msk [vmem:[#allocation3 + $0x28] sm:$0xff] %vm630, %v617
      %637 = vst.msk [vmem:[#allocation3 + $0x30] sm:$0xff] %vm630, %v619
      %638 = vst.msk [vmem:[#allocation3 + $0x38] sm:$0xff] %vm630, %v621
      %v639 = vld [vmem:[%s418 + $0x2] sm:$0xff]
      %v640 = vld [vmem:[%s418 + $0x12] sm:$0xff]
      %v641 = vld [vmem:[%s418 + $0x22] sm:$0xff]
      %v642 = vld [vmem:[%s418 + $0x32] sm:$0xff]
      %v643 = vld [vmem:[%s418 + $0x42] sm:$0xff]
      %v644 = vld [vmem:[%s418 + $0x52] sm:$0xff]
      %v645 = vld [vmem:[%s418 + $0x62] sm:$0xff]
      %v646 = vld [vmem:[%s418 + $0x72] sm:$0xff]
      %655 = vrot.lane.b32.xlu0 %v639, 40
      %v656 = vpop.permute.xlu0 %655
      %657 = vrot.lane.b32.xlu0 %v640, 40
      %v658 = vpop.permute.xlu0 %657
      %659 = vrot.lane.b32.xlu0 %v641, 40
      %v660 = vpop.permute.xlu0 %659
      %661 = vrot.lane.b32.xlu0 %v642, 40
      %v662 = vpop.permute.xlu0 %661
      %663 = vrot.lane.b32.xlu0 %v643, 40
      %v664 = vpop.permute.xlu0 %663
      %665 = vrot.lane.b32.xlu0 %v644, 40
      %v666 = vpop.permute.xlu0 %665
      %667 = vrot.lane.b32.xlu0 %v645, 40
      %v668 = vpop.permute.xlu0 %667
      %669 = vrot.lane.b32.xlu0 %v646, 40
      %v670 = vpop.permute.xlu0 %669
      %vm679 = vcmask 392512
      %680 = vst.msk [vmem:[#allocation3] sm:$0xff] %vm679, %v656
      %681 = vst.msk [vmem:[#allocation3 + $0x8] sm:$0xff] %vm679, %v658
      %682 = vst.msk [vmem:[#allocation3 + $0x10] sm:$0xff] %vm679, %v660
      %683 = vst.msk [vmem:[#allocation3 + $0x18] sm:$0xff] %vm679, %v662
      %684 = vst.msk [vmem:[#allocation3 + $0x20] sm:$0xff] %vm679, %v664
      %685 = vst.msk [vmem:[#allocation3 + $0x28] sm:$0xff] %vm679, %v666
      %686 = vst.msk [vmem:[#allocation3 + $0x30] sm:$0xff] %vm679, %v668
      %687 = vst.msk [vmem:[#allocation3 + $0x38] sm:$0xff] %vm679, %v670
      %s688 = scalar_lea.vmem [#allocation2], 32
      %v689 = vld [vmem:[%s688] sm:$0xff]
      %v690 = vld [vmem:[%s688 + $0x10] sm:$0xff]
      %v691 = vld [vmem:[%s688 + $0x20] sm:$0xff]
      %v692 = vld [vmem:[%s688 + $0x30] sm:$0xff]
      %v693 = vld [vmem:[%s688 + $0x40] sm:$0xff]
      %v694 = vld [vmem:[%s688 + $0x50] sm:$0xff]
      %v695 = vld [vmem:[%s688 + $0x60] sm:$0xff]
      %v696 = vld [vmem:[%s688 + $0x70] sm:$0xff]
      %705 = vrot.lane.b32.xlu0 %v689, 48
      %v706 = vpop.permute.xlu0 %705
      %707 = vrot.lane.b32.xlu0 %v690, 48
      %v708 = vpop.permute.xlu0 %707
      %709 = vrot.lane.b32.xlu0 %v691, 48
      %v710 = vpop.permute.xlu0 %709
      %711 = vrot.lane.b32.xlu0 %v692, 48
      %v712 = vpop.permute.xlu0 %711
      %713 = vrot.lane.b32.xlu0 %v693, 48
      %v714 = vpop.permute.xlu0 %713
      %715 = vrot.lane.b32.xlu0 %v694, 48
      %v716 = vpop.permute.xlu0 %715
      %717 = vrot.lane.b32.xlu0 %v695, 48
      %v718 = vpop.permute.xlu0 %717
      %719 = vrot.lane.b32.xlu0 %v696, 48
      %v720 = vpop.permute.xlu0 %719
      %vm729 = vcmask 458112
      %730 = vst.msk [vmem:[#allocation3] sm:$0xff] %vm729, %v706
      %731 = vst.msk [vmem:[#allocation3 + $0x8] sm:$0xff] %vm729, %v708
      %732 = vst.msk [vmem:[#allocation3 + $0x10] sm:$0xff] %vm729, %v710
      %733 = vst.msk [vmem:[#allocation3 + $0x18] sm:$0xff] %vm729, %v712
      %734 = vst.msk [vmem:[#allocation3 + $0x20] sm:$0xff] %vm729, %v714
      %735 = vst.msk [vmem:[#allocation3 + $0x28] sm:$0xff] %vm729, %v716
      %736 = vst.msk [vmem:[#allocation3 + $0x30] sm:$0xff] %vm729, %v718
      %737 = vst.msk [vmem:[#allocation3 + $0x38] sm:$0xff] %vm729, %v720
      %v738 = vld [vmem:[%s688 + $0x1] sm:$0xff]
      %v739 = vld [vmem:[%s688 + $0x11] sm:$0xff]
      %v740 = vld [vmem:[%s688 + $0x21] sm:$0xff]
      %v741 = vld [vmem:[%s688 + $0x31] sm:$0xff]
      %v742 = vld [vmem:[%s688 + $0x41] sm:$0xff]
      %v743 = vld [vmem:[%s688 + $0x51] sm:$0xff]
      %v744 = vld [vmem:[%s688 + $0x61] sm:$0xff]
      %v745 = vld [vmem:[%s688 + $0x71] sm:$0xff]
      %754 = vrot.lane.b32.xlu0 %v738, 56
      %v755 = vpop.permute.xlu0 %754
      %756 = vrot.lane.b32.xlu0 %v739, 56
      %v757 = vpop.permute.xlu0 %756
      %758 = vrot.lane.b32.xlu0 %v740, 56
      %v759 = vpop.permute.xlu0 %758
      %760 = vrot.lane.b32.xlu0 %v741, 56
      %v761 = vpop.permute.xlu0 %760
      %762 = vrot.lane.b32.xlu0 %v742, 56
      %v763 = vpop.permute.xlu0 %762
      %764 = vrot.lane.b32.xlu0 %v743, 56
      %v765 = vpop.permute.xlu0 %764
      %766 = vrot.lane.b32.xlu0 %v744, 56
      %v767 = vpop.permute.xlu0 %766
      %768 = vrot.lane.b32.xlu0 %v745, 56
      %v769 = vpop.permute.xlu0 %768
      %vm778 = vcmask 523712
      %779 = vst.msk [vmem:[#allocation3] sm:$0xff] %vm778, %v755
      %780 = vst.msk [vmem:[#allocation3 + $0x8] sm:$0xff] %vm778, %v757
      %781 = vst.msk [vmem:[#allocation3 + $0x10] sm:$0xff] %vm778, %v759
      %782 = vst.msk [vmem:[#allocation3 + $0x18] sm:$0xff] %vm778, %v761
      %783 = vst.msk [vmem:[#allocation3 + $0x20] sm:$0xff] %vm778, %v763
      %784 = vst.msk [vmem:[#allocation3 + $0x28] sm:$0xff] %vm778, %v765
      %785 = vst.msk [vmem:[#allocation3 + $0x30] sm:$0xff] %vm778, %v767
      %786 = vst.msk [vmem:[#allocation3 + $0x38] sm:$0xff] %vm778, %v769
      %v787 = vld [vmem:[%s688 + $0x2] sm:$0xff]
      %v788 = vld [vmem:[%s688 + $0x12] sm:$0xff]
      %v789 = vld [vmem:[%s688 + $0x22] sm:$0xff]
      %v790 = vld [vmem:[%s688 + $0x32] sm:$0xff]
      %v791 = vld [vmem:[%s688 + $0x42] sm:$0xff]
      %v792 = vld [vmem:[%s688 + $0x52] sm:$0xff]
      %v793 = vld [vmem:[%s688 + $0x62] sm:$0xff]
      %v794 = vld [vmem:[%s688 + $0x72] sm:$0xff]
      %803 = vrot.lane.b32.xlu0 %v787, 64
      %v804 = vpop.permute.xlu0 %803
      %805 = vrot.lane.b32.xlu0 %v788, 64
      %v806 = vpop.permute.xlu0 %805
      %807 = vrot.lane.b32.xlu0 %v789, 64
      %v808 = vpop.permute.xlu0 %807
      %809 = vrot.lane.b32.xlu0 %v790, 64
      %v810 = vpop.permute.xlu0 %809
      %811 = vrot.lane.b32.xlu0 %v791, 64
      %v812 = vpop.permute.xlu0 %811
      %813 = vrot.lane.b32.xlu0 %v792, 64
      %v814 = vpop.permute.xlu0 %813
      %815 = vrot.lane.b32.xlu0 %v793, 64
      %v816 = vpop.permute.xlu0 %815
      %817 = vrot.lane.b32.xlu0 %v794, 64
      %v818 = vpop.permute.xlu0 %817
      %vm827 = vcmask 589312
      %828 = vst.msk [vmem:[#allocation3] sm:$0xff] %vm827, %v804
      %829 = vst.msk [vmem:[#allocation3 + $0x8] sm:$0xff] %vm827, %v806
      %830 = vst.msk [vmem:[#allocation3 + $0x10] sm:$0xff] %vm827, %v808
      %831 = vst.msk [vmem:[#allocation3 + $0x18] sm:$0xff] %vm827, %v810
      %832 = vst.msk [vmem:[#allocation3 + $0x20] sm:$0xff] %vm827, %v812
      %833 = vst.msk [vmem:[#allocation3 + $0x28] sm:$0xff] %vm827, %v814
      %834 = vst.msk [vmem:[#allocation3 + $0x30] sm:$0xff] %vm827, %v816
      %835 = vst.msk [vmem:[#allocation3 + $0x38] sm:$0xff] %vm827, %v818
      %v836 = vld [vmem:[#allocation3] sm:$0xff]
      %v837 = vld [vmem:[#allocation3 + $0x8] sm:$0xff]
      %v838 = vld [vmem:[#allocation3 + $0x10] sm:$0xff]
      %v839 = vld [vmem:[#allocation3 + $0x18] sm:$0xff]
      %v840 = vld [vmem:[#allocation3 + $0x20] sm:$0xff]
      %v841 = vld [vmem:[#allocation3 + $0x28] sm:$0xff]
      %v842 = vld [vmem:[#allocation3 + $0x30] sm:$0xff]
      %v843 = vld [vmem:[#allocation3 + $0x38] sm:$0xff]
      %v844 = vpack.c.bf16 %v837, %v836
      %v845 = vpack.c.bf16 %v839, %v838
      %v846 = vpack.c.bf16 %v841, %v840
      %v847 = vpack.c.bf16 %v843, %v842
      %v848 = vld [vmem:[%s2] sm:$0xf]
      %v849 = vld [vmem:[%s2 + $0x4] sm:$0xf]
      %v850 = vld [vmem:[%s2 + $0x8] sm:$0xf]
      %v851 = vld [vmem:[%s2 + $0xc] sm:$0xf]
      %v852 = vld [vmem:[%s2 + $0x10] sm:$0xf]
      %v853 = vld [vmem:[%s2 + $0x14] sm:$0xf]
      %v854 = vld [vmem:[%s2 + $0x18] sm:$0xf]
      %v855 = vld [vmem:[%s2 + $0x1c] sm:$0xf]
      %v856 = vld [vmem:[%s2 + $0x20] sm:$0xf]
      %v866 = vunpack.c.l.b16 %v848
      %v867 = vunpack.c.l.b16 %v849
      %v868 = vunpack.c.l.b16 %v850
      %v869 = vunpack.c.l.b16 %v851
      %v870 = vunpack.c.l.b16 %v852
      %v871 = vunpack.c.l.b16 %v853
      %v872 = vunpack.c.l.b16 %v854
      %v873 = vunpack.c.l.b16 %v855
      %v874 = vunpack.c.l.b16 %v856
      %v875 = vpack.c.b16 %v867, %v866
      %v876 = vpack.c.b16 %v869, %v868
      %v877 = vpack.c.b16 %v871, %v870
      %v878 = vpack.c.b16 %v873, %v872
      %v879 = vpack.c.b16 %v874, %v874
      %vm884 = vcmask 588800
      %v886 = vsel %vm884, %v844, 0
      %v889 = vsel %vm884, %v845, 0
      %v892 = vsel %vm884, %v846, 0
      %v895 = vsel %vm884, %v847, 0
      %vm897 = vcmask 1043456
      %v899 = vsel %vm897, %v879, 0
      %901 = vmatprep.subr.bf16.mxu0 0
      %902 = vmatpush1.bf16.msra.mxu0 0
      %903 = vmatprep.subr.bf16.mxu0 0
      %904 = vmatpush1.bf16.msra.mxu0 0
      %905 = vmatprep.subr.bf16.mxu0 0
      %906 = vmatpush1.bf16.msra.mxu0 0
      %907 = vmatprep.subr.bf16.mxu0 0
      %908 = vmatpush1.bf16.msra.mxu0 %v899
      %909 = vmatprep.subr.bf16.mxu0 0
      %910 = vmatpush1.bf16.msra.mxu0 %v878
      %911 = vmatprep.subr.bf16.mxu0 0
      %912 = vmatpush1.bf16.msra.mxu0 %v877
      %913 = vmatprep.subr.bf16.mxu0 0
      %914 = vmatpush1.bf16.msra.mxu0 %v876
      %915 = vmatprep.subr.bf16.mxu0 0
      %916 = vmatpush1.bf16.msra.mxu0 %v875
      %917 = vmatprep.subr.bf16.mxu0 0
      %918 = vmatpush2.bf16.msra.mxu0 0
      %919 = vmatprep.subr.bf16.mxu0 0
      %920 = vmatpush2.bf16.msra.mxu0 0
      %921 = vmatprep.subr.bf16.mxu0 0
      %922 = vmatpush2.bf16.msra.mxu0 0
      %923 = vmatprep.subr.bf16.mxu0 0
      %924 = vmatpush2.bf16.msra.mxu0 0
      %925 = vmatprep.subr.bf16.mxu0 0
      %926 = vmatpush2.bf16.msra.mxu0 0
      %927 = vmatprep.subr.bf16.mxu0 0
      %928 = vmatpush2.bf16.msra.mxu0 0
      %929 = vmatprep.subr.bf16.mxu0 0
      %930 = vmatpush2.bf16.msra.mxu0 0
      %931 = vmatprep.subr.bf16.mxu0 0
      %932 = vmatpush2.bf16.msra.mxu0 0
      %933 = vmatprep.mubr.bf16.mxu0 0
      %934 = vmatmul.mubr.bf16.gmra.mxu0 %v886
      %v935 = vpop.f32.mrf.mxu0
      %v936 = vadd.f32 0.0, %v935
      %v937 = vpop.f32.mrf.mxu0
      %v938 = vpop.f32.mrf.mxu0
      %v939 = vadd.f32 0.0, %v938
      %v940 = vpop.f32.mrf.mxu0
      %941 = vmatprep.mubr.bf16.mxu0 0
      %942 = vmatmul.mubr.bf16.gmra.mxu0 %v889
      %v943 = vpop.f32.mrf.mxu0
      %v944 = vadd.f32 0.0, %v943
      %v945 = vpop.f32.mrf.mxu0
      %v946 = vpop.f32.mrf.mxu0
      %v947 = vadd.f32 0.0, %v946
      %v948 = vpop.f32.mrf.mxu0
      %949 = vmatprep.mubr.bf16.mxu0 0
      %950 = vmatmul.mubr.bf16.gmra.mxu0 %v892
      %v951 = vpop.f32.mrf.mxu0
      %v952 = vadd.f32 0.0, %v951
      %v953 = vpop.f32.mrf.mxu0
      %v954 = vpop.f32.mrf.mxu0
      %v955 = vadd.f32 0.0, %v954
      %v956 = vpop.f32.mrf.mxu0
      %957 = vmatprep.mubr.bf16.mxu0 0
      %958 = vmatmul.mubr.bf16.gmra.mxu0 %v895
      %v959 = vpop.f32.mrf.mxu0
      %v960 = vadd.f32 0.0, %v959
      %v961 = vpop.f32.mrf.mxu0
      %v962 = vpop.f32.mrf.mxu0
      %v963 = vadd.f32 0.0, %v962
      %v964 = vpop.f32.mrf.mxu0
      %965 = vdwg.mxu0
      %v966 = vsel %vm302, %v936, 0.0
      %v967 = vsel %vm302, %v939, 0.0
      %v968 = vadd.f32 %v966, %v967
      %v969 = vsel %vm302, %v944, 0.0
      %v970 = vadd.f32 %v968, %v969
      %v971 = vsel %vm302, %v947, 0.0
      %v972 = vadd.f32 %v970, %v971
      %v973 = vsel %vm302, %v952, 0.0
      %v974 = vadd.f32 %v972, %v973
      %v975 = vsel %vm302, %v955, 0.0
      %v976 = vadd.f32 %v974, %v975
      %v977 = vsel %vm302, %v960, 0.0
      %v978 = vadd.f32 %v976, %v977
      %v979 = vsel %vm302, %v963, 0.0
      %v980 = vadd.f32 %v978, %v979
      %v981 = vrot.slane %v980, 4
      %v982 = vadd.f32 %v980, %v981
      %v983 = vrot.slane %v982, 2
      %v984 = vadd.f32 %v982, %v983
      %v985 = vrot.slane %v984, 1
      %v986 = vadd.f32 %v984, %v985
      %v987 = vmul.f32 %v986, 0.015625
      %v988 = vsub.f32 %v936, %v987
      %v989 = vsub.f32 %v939, %v987
      %v990 = vsub.f32 %v944, %v987
      %v991 = vsub.f32 %v947, %v987
      %v992 = vsub.f32 %v952, %v987
      %v993 = vsub.f32 %v955, %v987
      %v994 = vsub.f32 %v960, %v987
      %v995 = vsub.f32 %v963, %v987
      %v996 = vmul.f32 %v988, %v988
      %v997 = vmul.f32 %v989, %v989
      %v998 = vmul.f32 %v990, %v990
      %v999 = vmul.f32 %v991, %v991
      %v1000 = vmul.f32 %v992, %v992
      %v1001 = vmul.f32 %v993, %v993
      %v1002 = vmul.f32 %v994, %v994
      %v1003 = vmul.f32 %v995, %v995
      %v1004 = vsel %vm302, %v996, 0.0
      %v1005 = vsel %vm302, %v997, 0.0
      %v1006 = vadd.f32 %v1004, %v1005
      %v1007 = vsel %vm302, %v998, 0.0
      %v1008 = vadd.f32 %v1006, %v1007
      %v1009 = vsel %vm302, %v999, 0.0
      %v1010 = vadd.f32 %v1008, %v1009
      %v1011 = vsel %vm302, %v1000, 0.0
      %v1012 = vadd.f32 %v1010, %v1011
      %v1013 = vsel %vm302, %v1001, 0.0
      %v1014 = vadd.f32 %v1012, %v1013
      %v1015 = vsel %vm302, %v1002, 0.0
      %v1016 = vadd.f32 %v1014, %v1015
      %v1017 = vsel %vm302, %v1003, 0.0
      %v1018 = vadd.f32 %v1016, %v1017
      %v1019 = vrot.slane %v1018, 4
      %v1020 = vadd.f32 %v1018, %v1019
      %v1021 = vrot.slane %v1020, 2
      %v1022 = vadd.f32 %v1020, %v1021
      %v1023 = vrot.slane %v1022, 1
      %v1024 = vadd.f32 %v1022, %v1023
      %v1025 = vmul.f32 %v1024, 0.015625
      %v1026 = vadd.f32 %v1025, 1e-05
      %v1027 = vrsqrt.pop %v1026
      %v1028 = vmul.f32 %v988, %v1027
      %v1029 = vmul.f32 %v989, %v1027
      %v1030 = vmul.f32 %v990, %v1027
      %v1031 = vmul.f32 %v991, %v1027
      %v1032 = vmul.f32 %v992, %v1027
      %v1033 = vmul.f32 %v993, %v1027
      %v1034 = vmul.f32 %v994, %v1027
      %v1035 = vmul.f32 %v995, %v1027
      %vm1036 = vcmp.ge.f32.partialorder %v1028, 0.0
      %vm1037 = vcmp.ge.f32.partialorder %v1029, 0.0
      %vm1038 = vcmp.ge.f32.partialorder %v1030, 0.0
      %vm1039 = vcmp.ge.f32.partialorder %v1031, 0.0
      %vm1040 = vcmp.ge.f32.partialorder %v1032, 0.0
      %vm1041 = vcmp.ge.f32.partialorder %v1033, 0.0
      %vm1042 = vcmp.ge.f32.partialorder %v1034, 0.0
      %vm1043 = vcmp.ge.f32.partialorder %v1035, 0.0
      %v1044 = vmul.f32 %v1028, 0.01
      %v1045 = vmul.f32 %v1029, 0.01
      %v1046 = vmul.f32 %v1030, 0.01
      %v1047 = vmul.f32 %v1031, 0.01
      %v1048 = vmul.f32 %v1032, 0.01
      %v1049 = vmul.f32 %v1033, 0.01
      %v1050 = vmul.f32 %v1034, 0.01
      %v1051 = vmul.f32 %v1035, 0.01
      %v1052 = vsel %vm1036, %v1028, %v1044
      %v1053 = vsel %vm1037, %v1029, %v1045
      %v1054 = vsel %vm1038, %v1030, %v1046
      %v1055 = vsel %vm1039, %v1031, %v1047
      %v1056 = vsel %vm1040, %v1032, %v1048
      %v1057 = vsel %vm1041, %v1033, %v1049
      %v1058 = vsel %vm1042, %v1034, %v1050
      %v1059 = vsel %vm1043, %v1035, %v1051
      %1060 = vst.msk [vmem:[%s170] sm:$0xff] %vm302, %v1052
      %1061 = vst.msk [vmem:[%s170 + $0x8] sm:$0xff] %vm302, %v1053
      %1062 = vst.msk [vmem:[%s170 + $0x10] sm:$0xff] %vm302, %v1054
      %1063 = vst.msk [vmem:[%s170 + $0x18] sm:$0xff] %vm302, %v1055
      %1064 = vst.msk [vmem:[%s170 + $0x20] sm:$0xff] %vm302, %v1056
      %1065 = vst.msk [vmem:[%s170 + $0x28] sm:$0xff] %vm302, %v1057
      %1066 = vst.msk [vmem:[%s170 + $0x30] sm:$0xff] %vm302, %v1058
      %1067 = vst.msk [vmem:[%s170 + $0x38] sm:$0xff] %vm302, %v1059
      %p1068 = scmp.lt.s32.totalorder %s14, 1
      %s1069 = scalar_select %p1068, %s14, 1
      %s1070 = smul.addr %s1069, 8
      %s1071 = smul.addr %s1070, 8
      %s1072 = scalar_lea.vmem %s3, %s1071
      // Predicated region
      $region33: #{down_conv.1} parent=31 // pred_check
        %p1073 = pneg %p100
      $region34: #{down_conv.1} parent=31 // pred_check_branch
        %1075 = sbr.rel (%p1073) target = $region36
      $region35: #{down_conv.1} parent=31 // pred_region
        _
      $region36: #{down_conv.1} parent=31 // pred_fallthru
        _
    $region32: #{down_conv.1} parent=5 // pred_fallthru
      _
    %p1076 = scmp.le.s32.totalorder 2, %s9
    // Predicated region
    $region37: #{down_conv.1} parent=5 // pred_check
      %p1077 = pneg %p1076
    $region38: #{down_conv.1} parent=5 // pred_check_branch
      %1079 = sbr.rel (%p1077) target = $region40
    $region39: #{down_conv.1} parent=5 // pred_region
      %s1080 = ssub.s32 %s9, 2
      // Predicated region
      $region41: #{down_conv.1} parent=39 // pred_check
        %p1081 = pneg %p106
      $region42: #{down_conv.1} parent=39 // pred_check_branch
        %1083 = sbr.rel (%p1081) target = $region44
      $region43: #{down_conv.1} parent=39 // pred_region
        %p1084 = scmp.lt.s32.totalorder %s15, 1
        %s1085 = scalar_select %p1084, %s15, 1
        %s1086 = smul.addr %s1085, 8
        %s1087 = smul.addr %s1086, 8
        %s1088 = scalar_lea.vmem %s3, %s1087
      $region44: #{down_conv.1} parent=39 // pred_fallthru
        _
    $region40: #{down_conv.1} parent=5 // pred_fallthru
      _
  $region6: #{down_conv.1} parent=0 // loop_footer
    %s13 = sadd.s32 1, %s9
  $region7: #{down_conv.1} parent=0 // loop_footer_branch
    %8 = sbr.rel target = $region3
  $region8: #{down_conv.1} parent=0 // loop_exit
    _

</llo_original>
